<compile_context>
chip_gen: v7x
topology: tpu7x:2x2x1
jax: 0.10.0
libtpu: 0.0.40
codegen_flags: <defaults>
</compile_context>

<pallas_src>
import functools

import jax
import jax.numpy as jnp
from jax.experimental import pallas as pl
from jax.experimental.pallas import tpu as pltpu


def _round_up(x, m):
    return ((x + m - 1) // m) * m


def _final_layer_kernel(x_ref, w_ref, st_ref, o_ref, *, inv_dim, eps,
                        mm_precision):
    # x_ref : (1, TN, dim)        token tile (input dtype)
    # w_ref : (1, dim, out_f+1)   [ (1+scale)_b * W_lin | ones ] (input dtype)
    # st_ref: (1, 2, out_f)       row 0: colsum(folded W), row 1: shift@W + b (f32)
    # o_ref : (1, TN, out_f)
    out_f = o_ref.shape[-1]
    x = x_ref[0]                                        # (TN, dim)
    w = w_ref[0]                                        # (dim, out_f+1)

    # One MXU pass gives both the folded projection and (via the ones column)
    # the per-row sum used for the LayerNorm mean.
    acc = jnp.dot(x, w, preferred_element_type=jnp.float32,
                  precision=mm_precision)               # (TN, out_f+1) f32
    xw = acc[:, :out_f]                                 # (TN, out_f)
    mean = acc[:, out_f:] * inv_dim                     # (TN, 1)

    # Variance via single-pass E[x^2] - mean^2 in f32 (fine for normalized
    # activations; the only full-width VPU work left is the square, the
    # row-reduction goes to the XLU slot).
    xf = x.astype(jnp.float32)
    ex2 = jnp.mean(xf * xf, axis=-1, keepdims=True)     # (TN, 1)
    rstd = jax.lax.rsqrt(ex2 - mean * mean + eps)       # (TN, 1)

    st = st_ref[0]                                      # (2, out_f) f32
    s = st[0:1, :]                                      # colsum of folded W
    t = st[1:2, :]                                      # shift @ W + b
    # Narrow (TN, out_f) epilogue: ~out_f/dim of full-width work.
    out = rstd * (xw - mean * s) + t
    o_ref[0] = out.astype(o_ref.dtype)


def final_layer(x, c, w_mod, b_mod, w_lin, b_lin, *, tile_n=None,
                vmem_limit_bytes=None, x_buffers=None):
    """Fused FinalLayer forward.

    x: (B, N, dim), c: (B, dim), w_mod: (dim, 2*dim), b_mod: (2*dim,),
    w_lin: (dim, out_f), b_lin: (out_f,).  Returns (B, N, out_f) in x.dtype.
    """
    B, N, dim = x.shape
    out_f = w_lin.shape[-1]
    xdt = x.dtype
    itemsize = jnp.dtype(xdt).itemsize
    f32 = jnp.float32
    # f32 operands keep full MXU precision; bf16 stays on the fast path.
    mm_precision = jax.lax.Precision.HIGHEST if itemsize >= 4 else None

    # ---- modulation branch on XLA (M=B matmul is MXU-hostile and its
    # 2*dim^2 weight would dominate VMEM if kept in-kernel) ------------------
    mod = (jax.nn.silu(c.astype(f32)) @ w_mod.astype(f32)) + b_mod.astype(f32)
    # modulate(norm(x), shift, scale) against def modulate(x, scale, shift):
    # the FIRST chunk of `mod` multiplies, the SECOND adds.
    scale1 = 1.0 + mod[:, :dim]                              # (B, dim)
    shift = mod[:, dim:]                                     # (B, dim)

    # ---- fold modulation (and the mean term) through the projection --------
    #   out = rstd*((x - mean)*scale1) @ W + shift @ W + b
    #       = rstd*( x @ (scale1*W) - mean*colsum(scale1*W) ) + (shift@W + b)
    w_f = w_lin.astype(f32)
    w_fold = scale1[:, :, None] * w_f[None]                  # (B, dim, out_f)
    ones_col = jnp.ones((B, dim, 1), f32)                    # -> row sums
    w_aug = jnp.concatenate([w_fold, ones_col], axis=-1).astype(xdt)
    # colsum of the weight the kernel actually uses (post-cast) so the mean
    # correction matches the matmul exactly.
    s_b = jnp.sum(w_aug[..., :out_f].astype(f32), axis=1)    # (B, out_f)
    t_b = (jnp.einsum('bd,df->bf', shift, w_f, precision='highest')
           + b_lin.astype(f32))                              # (B, out_f)
    st = jnp.stack([s_b, t_b], axis=1)                       # (B, 2, out_f)

    # ---- generation-aware VMEM limit & budget-derived token tile -----------
    if vmem_limit_bytes is None:
        try:
            cap = int(pltpu.get_tpu_info().vmem_capacity_bytes)
        except Exception:
            cap = 64 * 1024 * 1024          # conservative (v7x-sized) fallback
        vmem_limit_bytes = min(int(cap * 0.70), 96 * 1024 * 1024)

    sub = {4: 8, 2: 16, 1: 32}.get(itemsize, 8)   # dtype sublane packing
    if tile_n is None:
        per_token = 2 * dim * itemsize                      # x double-buffer
        per_token += dim * 4                                # f32 x*x temporaries
        per_token += 2 * _round_up(out_f, 128) * itemsize   # lane-padded out dbuf
        fixed = 2 * dim * _round_up(out_f + 1, 128) * itemsize   # w_aug dbuf
        fixed += 2 * 1024 * 1024                            # compiler scratch slack
        tile_n = (int(vmem_limit_bytes * 0.8) - fixed) // per_token
        tile_n = max(sub, min(int(tile_n), 2048))

    tn = min(int(tile_n), N)
    if tn < N:
        align = 256 if tn >= 256 else sub       # MXU-M / sublane alignment
        tn = max(sub, (tn // align) * align)
        if tn >= N:
            tn = N
        else:
            # Prefer an even grid so v7x's two TensorCores split evenly.
            n_tiles = pl.cdiv(N, tn)
            if (B * n_tiles) % 2 == 1:
                cand = tn - align
                for _ in range(4):
                    if cand < align:
                        break
                    if (B * pl.cdiv(N, cand)) % 2 == 0:
                        tn = cand
                        break
                    cand -= align

    grid = (B, pl.cdiv(N, tn))

    x_spec_kwargs = {}
    if x_buffers is not None:   # e.g. 3 on v5e/v6e to deepen the HBM stream
        x_spec_kwargs = dict(pipeline_mode=pl.Buffered(int(x_buffers)))

    kernel = functools.partial(_final_layer_kernel, inv_dim=1.0 / dim,
                               eps=1e-6, mm_precision=mm_precision)

    return pl.pallas_call(
        kernel,
        out_shape=jax.ShapeDtypeStruct((B, N, out_f), xdt),
        grid_spec=pltpu.PrefetchScalarGridSpec(
            num_scalar_prefetch=0,
            grid=grid,
            in_specs=[
                pl.BlockSpec((1, tn, dim), lambda b, j: (b, j, 0),
                             **x_spec_kwargs),
                # Per-batch blocks: constant along the token axis -> fetched
                # once per batch change and VMEM-resident while tokens stream.
                pl.BlockSpec((1, dim, out_f + 1), lambda b, j: (b, 0, 0)),
                pl.BlockSpec((1, 2, out_f), lambda b, j: (b, 0, 0)),
            ],
            out_specs=pl.BlockSpec((1, tn, out_f), lambda b, j: (b, j, 0)),
        ),
        compiler_params=pltpu.CompilerParams(
            dimension_semantics=("parallel", "parallel"),
            vmem_limit_bytes=int(vmem_limit_bytes),
        ),
    )(x, w_aug, st)


def final_layer_ref(x, c, w_mod, b_mod, w_lin, b_lin):
    """Pure-JAX mirror of the PyTorch FinalLayer.forward (f32 math)."""
    dim = x.shape[-1]
    x = x.astype(jnp.float32)
    mod = (jax.nn.silu(c.astype(jnp.float32)) @ w_mod.astype(jnp.float32)
           + b_mod.astype(jnp.float32))
    shift, scale = mod[:, :dim], mod[:, dim:]        # .chunk(2, dim=-1)
    mean = jnp.mean(x, axis=-1, keepdims=True)
    var = jnp.mean((x - mean) ** 2, axis=-1, keepdims=True)
    xn = (x - mean) / jnp.sqrt(var + 1e-6)
    # modulate(xn, shift, scale) with def modulate(x, scale, shift):
    #   -> xn * (1 + shift[:, None]) + scale[:, None]
    y = xn * (1.0 + shift[:, None, :]) + scale[:, None, :]
    return (jnp.einsum('bnd,df->bnf', y, w_lin.astype(jnp.float32),
                       precision='highest')
            + b_lin.astype(jnp.float32))


if __name__ == "__main__":
    # Small, module-consistent shapes (dim multiple of 128; N tiled by 8).
    B, N, dim = 2, 16, 128
    patch_size, out_dim = 2, 4
    out_f = patch_size * patch_size * out_dim        # 16

    key = jax.random.PRNGKey(0)
    kx, kc, k1, k2, k3, k4 = jax.random.split(key, 6)

    x = jax.random.normal(kx, (B, N, dim), dtype=jnp.float32)
    c = jax.random.normal(kc, (B, dim), dtype=jnp.float32)

    # Synthetic parameters (shapes from module __init__):
    # modulation = Sequential(SiLU, Linear(dim, 2*dim)); linear = Linear(dim, p*p*out_dim)
    w_mod = jax.random.normal(k1, (dim, 2 * dim), dtype=jnp.float32) * 0.02
    b_mod = jax.random.normal(k2, (2 * dim,), dtype=jnp.float32) * 0.02
    w_lin = jax.random.normal(k3, (dim, out_f), dtype=jnp.float32) * 0.02
    b_lin = jax.random.normal(k4, (out_f,), dtype=jnp.float32) * 0.02

    ref = final_layer_ref(x, c, w_mod, b_mod, w_lin, b_lin)

    # Default path: budget-derived tile (full-N block at this toy size).
    out = jax.block_until_ready(final_layer(x, c, w_mod, b_mod, w_lin, b_lin))
    assert out.shape == (B, N, out_f)
    assert jnp.allclose(out, ref, atol=2e-3, rtol=2e-3), float(
        jnp.max(jnp.abs(out - ref)))

    # Explicit small tile to exercise the (batch, token-tile) grid path.
    out2 = jax.block_until_ready(
        final_layer(x, c, w_mod, b_mod, w_lin, b_lin, tile_n=8))
    assert jnp.allclose(out2, ref, atol=2e-3, rtol=2e-3), float(
        jnp.max(jnp.abs(out2 - ref)))

    print("KERNEL_OK")
</pallas_src>

<mosaic_0001>
module attributes {stable_mosaic.version = 11 : i64} {
  func.func @_final_layer_kernel(%arg0: i32, %arg1: i32, %arg2: memref<1x16x128xf32, #tpu.memory_space<vmem>>, %arg3: memref<1x128x17xf32, #tpu.memory_space<vmem>>, %arg4: memref<1x2x16xf32, #tpu.memory_space<vmem>>, %arg5: memref<1x16x16xf32, #tpu.memory_space<vmem>>) attributes {dimension_semantics = [#tpu.dimension_semantics<parallel>, #tpu.dimension_semantics<parallel>], iteration_bounds = array<i64: 2, 1>, scalar_prefetch = 0 : i64, scratch_operands = 0 : i64, tpu.core_type = #tpu.core_type<tc>, window_params = [{transform_indices = @transform_0, window_bounds = array<i64: 1, 16, 128>}, {transform_indices = @transform_1, window_bounds = array<i64: 1, 128, 17>}, {transform_indices = @transform_2, window_bounds = array<i64: 1, 2, 16>}, {transform_indices = @transform_3, window_bounds = array<i64: 1, 16, 16>}]} {
    %c0 = arith.constant 0 : index
    %c0_0 = arith.constant 0 : index
    %c0_1 = arith.constant 0 : index
    %0 = vector.load %arg2[%c0, %c0_0, %c0_1] : memref<1x16x128xf32, #tpu.memory_space<vmem>>, vector<1x16x128xf32>
    %1 = vector.shape_cast %0 : vector<1x16x128xf32> to vector<16x128xf32>
    %c0_2 = arith.constant 0 : index
    %c0_3 = arith.constant 0 : index
    %c0_4 = arith.constant 0 : index
    %2 = vector.load %arg3[%c0_2, %c0_3, %c0_4] : memref<1x128x17xf32, #tpu.memory_space<vmem>>, vector<1x128x17xf32>
    %3 = vector.shape_cast %2 : vector<1x128x17xf32> to vector<128x17xf32>
    %cst = arith.constant dense<0.000000e+00> : vector<16x17xf32>
    %4 = tpu.matmul %1, %3, %cst {dimension_numbers = #tpu.dot_dimension_numbers<[1], [0], [0], [1], [0, 0, 1, 1], [], []>, precision = #tpu.contract_precision<fp32>} : vector<16x128xf32>, vector<128x17xf32>, vector<16x17xf32> -> vector<16x17xf32>
    %5 = vector.extract_strided_slice %4 {offsets = [0, 0], sizes = [16, 16], strides = [1, 1]} : vector<16x17xf32> to vector<16x16xf32>
    %6 = vector.extract_strided_slice %4 {offsets = [0, 16], sizes = [16, 1], strides = [1, 1]} : vector<16x17xf32> to vector<16x1xf32>
    %cst_5 = arith.constant 7.812500e-03 : f32
    %7 = vector.broadcast %cst_5 : f32 to vector<16x1xf32>
    %8 = arith.mulf %6, %7 : vector<16x1xf32>
    %9 = arith.mulf %1, %1 : vector<16x128xf32>
    %cst_6 = arith.constant dense<0.000000e+00> : vector<16xf32>
    %10 = vector.multi_reduction <add>, %9, %cst_6 [1] : vector<16x128xf32> to vector<16xf32>
    %11 = vector.shape_cast %10 : vector<16xf32> to vector<16x1xf32>
    %cst_7 = arith.constant 1.280000e+02 : f32
    %12 = vector.broadcast %cst_7 : f32 to vector<16x1xf32>
    %13 = arith.divf %11, %12 : vector<16x1xf32>
    %14 = arith.mulf %8, %8 : vector<16x1xf32>
    %15 = arith.subf %13, %14 : vector<16x1xf32>
    %cst_8 = arith.constant 9.99999997E-7 : f32
    %16 = vector.broadcast %cst_8 : f32 to vector<16x1xf32>
    %17 = arith.addf %15, %16 : vector<16x1xf32>
    %18 = math.rsqrt %17 : vector<16x1xf32>
    %c0_9 = arith.constant 0 : index
    %c0_10 = arith.constant 0 : index
    %c0_11 = arith.constant 0 : index
    %19 = vector.load %arg4[%c0_9, %c0_10, %c0_11] : memref<1x2x16xf32, #tpu.memory_space<vmem>>, vector<1x2x16xf32>
    %20 = vector.shape_cast %19 : vector<1x2x16xf32> to vector<2x16xf32>
    %21 = vector.extract_strided_slice %20 {offsets = [0, 0], sizes = [1, 16], strides = [1, 1]} : vector<2x16xf32> to vector<1x16xf32>
    %22 = vector.extract_strided_slice %20 {offsets = [1, 0], sizes = [1, 16], strides = [1, 1]} : vector<2x16xf32> to vector<1x16xf32>
    %23 = vector.broadcast %8 : vector<16x1xf32> to vector<16x16xf32>
    %24 = vector.broadcast %21 : vector<1x16xf32> to vector<16x16xf32>
    %25 = arith.mulf %23, %24 : vector<16x16xf32>
    %26 = arith.subf %5, %25 : vector<16x16xf32>
    %27 = vector.broadcast %18 : vector<16x1xf32> to vector<16x16xf32>
    %28 = arith.mulf %27, %26 : vector<16x16xf32>
    %29 = vector.broadcast %22 : vector<1x16xf32> to vector<16x16xf32>
    %30 = arith.addf %28, %29 : vector<16x16xf32>
    %c0_12 = arith.constant 0 : index
    %c0_13 = arith.constant 0 : index
    %c0_14 = arith.constant 0 : index
    %31 = vector.load %arg5[%c0_12, %c0_13, %c0_14] : memref<1x16x16xf32, #tpu.memory_space<vmem>>, vector<1x16x16xf32>
    %32 = vector.shape_cast %31 : vector<1x16x16xf32> to vector<16x16xf32>
    %33 = vector.shape_cast %30 : vector<16x16xf32> to vector<1x16x16xf32>
    tpu.vector_store %arg5[%c0_12, %c0_13, %c0_14], %33 {strides = array<i32>} : memref<1x16x16xf32, #tpu.memory_space<vmem>>, vector<1x16x16xf32>,
    return
  }
  func.func @transform_0(%arg0: i32, %arg1: i32) -> (i32, i32, i32) {
    %c0_i32 = arith.constant 0 : i32
    %c0_i32_0 = arith.constant 0 : i32
    return %arg0, %arg1, %c0_i32 : i32, i32, i32
  }
  func.func @transform_1(%arg0: i32, %arg1: i32) -> (i32, i32, i32) {
    %c0_i32 = arith.constant 0 : i32
    %c0_i32_0 = arith.constant 0 : i32
    %c0_i32_1 = arith.constant 0 : i32
    return %arg0, %c0_i32, %c0_i32_0 : i32, i32, i32
  }
  func.func @transform_2(%arg0: i32, %arg1: i32) -> (i32, i32, i32) {
    %c0_i32 = arith.constant 0 : i32
    %c0_i32_0 = arith.constant 0 : i32
    %c0_i32_1 = arith.constant 0 : i32
    return %arg0, %c0_i32, %c0_i32_0 : i32, i32, i32
  }
  func.func @transform_3(%arg0: i32, %arg1: i32) -> (i32, i32, i32) {
    %c0_i32 = arith.constant 0 : i32
    %c0_i32_0 = arith.constant 0 : i32
    return %arg0, %arg1, %c0_i32 : i32, i32, i32
  }
}

</mosaic_0001>

<llo_original>
// kernel: tpu_custom_call.1
$region0: #{tpu_custom_call.1}
  #allocation0 [shape = 'u32[]', space=smem, size = 0x4, offset = 0x4, fixed_abs, tag = 'smem constant byte address 0x4 - core index']
  #allocation1 [shape = 'u32[144,128]{1,0:T(1,128)}', space=vmem, size = 0x12000, scoped, tag = 'internal scratch']
  %s0 = inlined_call_operand.vmem [shape: f32[2,16,128], index: 0, kind: input, shape index: {}]
  %s1 = inlined_call_operand.vmem [shape: f32[2,128,17], index: 1, kind: input, shape index: {}]
  %s2 = inlined_call_operand.vmem [shape: f32[2,2,16], index: 2, kind: input, shape index: {}]
  %s3 = inlined_call_operand.hbm [shape: f32[2,16,16], index: 3, kind: output, shape index: {}]
  %s4 = sld [smem:[#allocation0]]
  $region45: #{tpu_custom_call.1} parent=0
    _
  %s6 = ssub.s32 1, %s4
  %s7 = scalar_select 0, %s6, %s4
  $region1: #{tpu_custom_call.1} parent=0
    #allocation2 [shape = 'u8[16384]{0}', space=vmem, size = 0x4000, scoped, tag = 'output window, operand 0']
    #allocation3 [shape = 's32[2]{0}', space=sflag, size = 0x8, scoped, tag = 'scoped memory for tpu_custom_call.1']
    %8 = vsyncpa [#allocation3], 0
    %s9 = scalar_lea.sflag [#allocation3], 1
    %10 = vsyncpa %s9, 0
    loop: start=0, step=1, limit=4
    $region2: #{tpu_custom_call.1} parent=1 // loop_pre_header
      _
    $region3: #{tpu_custom_call.1} parent=1 // loop_header
      %s12 = sphi 0, %s16
      %p13 = scmp.ge.s32.totalorder %s12, 4
      %s19 = sphi 0, %s31
      %s20 = sphi 0, %s27
      %s21 = sphi 0, %s19
      %s22 = sphi 0, %s20
      %s23 = sphi 0, %s21
      %s24 = sphi 0, %s22
      %s36 = sphi 0, %s38
      %s39 = sphi 0, %s36
      %s40 = sphi 0, %s39
      %s56 = sphi 0, %s40
      %s62 = sphi 0, %s64
      %s65 = sphi 0, %s62
      %s66 = sphi 0, %s65
      %s82 = sphi 0, %s66
      %s88 = sphi 0, %s90
      %s91 = sphi 0, %s88
      %s92 = sphi 0, %s91
      %s108 = sphi 0, %s92
      %s116 = sphi 0, %s118
      %s119 = sphi 0, %s116
      %s120 = sphi 0, %s119
      %s136 = sphi 0, %s120
    $region4: #{tpu_custom_call.1} parent=1 // loop_header_branch
      %15 = sbr.rel (%p13) target = $region8
    $region5: #{tpu_custom_call.1} parent=1 // loop_body
      %s17 = ssub.s32 %s12, 1
      %s18 = ssub.s32 %s12, 2
      %s25 = sadd.s32 1, %s20
      %p26 = scmp.ge.s32.totalorder %s25, 1
      %s27 = scalar_select %p26, 0, %s25
      %s28 = sadd.s32 1, %s19
      %s29 = scalar_select %p26, %s28, %s19
      %p30 = scmp.ge.s32.totalorder %s29, 2
      %s31 = scalar_select %p30, 0, %s29
      %s32 = ssub.s32 %s19, %s31
      %s33 = ssub.s32 %s20, %s27
      %s34 = sor.u32 %s32, %s33
      %p35 = scmp.eq.s32.totalorder %s34, 0
      %s37 = sadd.s32 %s36, 1
      %s38 = scalar_select %p35, %s36, %s37
      %p41 = pneg %p35
      %p42 = scmp.eq.s32.totalorder %s12, 1
      %p43 = por %p41, %p42
      %p44 = scmp.ne.s32.totalorder %s36, %s39
      %p45 = scmp.eq.s32.totalorder %s12, 0
      %p46 = por %p44, %p45
      %p47 = scmp.ne.s32.totalorder %s36, %s39
      %p48 = scmp.eq.s32.totalorder %s17, 1
      %p49 = por %p47, %p48
      %p50 = scmp.ne.s32.totalorder %s39, %s40
      %p51 = scmp.eq.s32.totalorder %s17, 0
      %p52 = por %p50, %p51
      %p53 = scmp.ne.s32.totalorder %s39, %s40
      %p54 = scmp.eq.s32.totalorder %s18, 1
      %p55 = por %p53, %p54
      %p57 = scmp.ne.s32.totalorder %s40, %s56
      %p58 = scmp.eq.s32.totalorder %s18, 0
      %p59 = por %p57, %p58
      %s60 = ssub.s32 %s19, %s31
      %p61 = scmp.eq.s32.totalorder %s60, 0
      %s63 = sadd.s32 %s62, 1
      %s64 = scalar_select %p61, %s62, %s63
      %p67 = pneg %p61
      %p68 = scmp.eq.s32.totalorder %s12, 1
      %p69 = por %p67, %p68
      %p70 = scmp.ne.s32.totalorder %s62, %s65
      %p71 = scmp.eq.s32.totalorder %s12, 0
      %p72 = por %p70, %p71
      %p73 = scmp.ne.s32.totalorder %s62, %s65
      %p74 = scmp.eq.s32.totalorder %s17, 1
      %p75 = por %p73, %p74
      %p76 = scmp.ne.s32.totalorder %s65, %s66
      %p77 = scmp.eq.s32.totalorder %s17, 0
      %p78 = por %p76, %p77
      %p79 = scmp.ne.s32.totalorder %s65, %s66
      %p80 = scmp.eq.s32.totalorder %s18, 1
      %p81 = por %p79, %p80
      %p83 = scmp.ne.s32.totalorder %s66, %s82
      %p84 = scmp.eq.s32.totalorder %s18, 0
      %p85 = por %p83, %p84
      %s86 = ssub.s32 %s19, %s31
      %p87 = scmp.eq.s32.totalorder %s86, 0
      %s89 = sadd.s32 %s88, 1
      %s90 = scalar_select %p87, %s88, %s89
      %p93 = pneg %p87
      %p94 = scmp.eq.s32.totalorder %s12, 1
      %p95 = por %p93, %p94
      %p96 = scmp.ne.s32.totalorder %s88, %s91
      %p97 = scmp.eq.s32.totalorder %s12, 0
      %p98 = por %p96, %p97
      %p99 = scmp.ne.s32.totalorder %s88, %s91
      %p100 = scmp.eq.s32.totalorder %s17, 1
      %p101 = por %p99, %p100
      %p102 = scmp.ne.s32.totalorder %s91, %s92
      %p103 = scmp.eq.s32.totalorder %s17, 0
      %p104 = por %p102, %p103
      %p105 = scmp.ne.s32.totalorder %s91, %s92
      %p106 = scmp.eq.s32.totalorder %s18, 1
      %p107 = por %p105, %p106
      %p109 = scmp.ne.s32.totalorder %s92, %s108
      %p110 = scmp.eq.s32.totalorder %s18, 0
      %p111 = por %p109, %p110
      %s112 = ssub.s32 %s19, %s31
      %s113 = ssub.s32 %s20, %s27
      %s114 = sor.u32 %s112, %s113
      %p115 = scmp.eq.s32.totalorder %s114, 0
      %s117 = sadd.s32 %s116, 1
      %s118 = scalar_select %p115, %s116, %s117
      %p121 = pneg %p115
      %p122 = scmp.eq.s32.totalorder %s12, 1
      %p123 = por %p121, %p122
      %p124 = scmp.ne.s32.totalorder %s116, %s119
      %p125 = scmp.eq.s32.totalorder %s12, 0
      %p126 = por %p124, %p125
      %p127 = scmp.ne.s32.totalorder %s116, %s119
      %p128 = scmp.eq.s32.totalorder %s17, 1
      %p129 = por %p127, %p128
      %p130 = scmp.ne.s32.totalorder %s119, %s120
      %p131 = scmp.eq.s32.totalorder %s17, 0
      %p132 = por %p130, %p131
      %p133 = scmp.ne.s32.totalorder %s119, %s120
      %p134 = scmp.eq.s32.totalorder %s18, 1
      %p135 = por %p133, %p134
      %p137 = scmp.ne.s32.totalorder %s120, %s136
      %p138 = scmp.eq.s32.totalorder %s18, 0
      %p139 = por %p137, %p138
      %p140 = scmp.le.s32.totalorder 1, %s12
      %p141 = scmp.lt.s32.totalorder %s12, 3
      %p142 = pnand %p140, %p141
      %p143 = pneg %p142
      // Predicated region
      $region9: #{tpu_custom_call.1} parent=5 // pred_check
        _
      $region10: #{tpu_custom_call.1} parent=5 // pred_check_branch
        %145 = sbr.rel (%p142) target = $region12
      $region11: #{tpu_custom_call.1} parent=5 // pred_region
        %s146 = ssub.s32 %s12, 1
      $region12: #{tpu_custom_call.1} parent=5 // pred_fallthru
        _
      %p147 = scmp.lt.s32.totalorder %s12, 2
      // Predicated region
      $region13: #{tpu_custom_call.1} parent=5 // pred_check
        %p148 = pneg %p147
      $region14: #{tpu_custom_call.1} parent=5 // pred_check_branch
        %150 = sbr.rel (%p148) target = $region16
      $region15: #{tpu_custom_call.1} parent=5 // pred_region
        // Predicated region
        $region17: #{tpu_custom_call.1} parent=15 // pred_check
          %p151 = pneg %p46
        $region18: #{tpu_custom_call.1} parent=15 // pred_check_branch
          %153 = sbr.rel (%p151) target = $region20
        $region19: #{tpu_custom_call.1} parent=15 // pred_region
          %s154 = smul.u32 2, %s20
          %p155 = scmp.lt.s32.totalorder %s19, 1
          %s156 = scalar_select %p155, %s19, 1
          %p157 = scmp.lt.s32.totalorder %s154, 1
          %s158 = scalar_select %p157, %s154, 1
          %s159 = smul.addr %s156, 2
          %s160 = sadd.s32 %s158, %s159
          %s161 = smul.addr %s160, 8
          %s162 = scalar_lea.vmem %s0, %s161
          %s163 = smul.u32 2, %s20
        $region20: #{tpu_custom_call.1} parent=15 // pred_fallthru
          _
        // Predicated region
        $region21: #{tpu_custom_call.1} parent=15 // pred_check
          %p164 = pneg %p72
        $region22: #{tpu_custom_call.1} parent=15 // pred_check_branch
          %166 = sbr.rel (%p164) target = $region24
        $region23: #{tpu_custom_call.1} parent=15 // pred_region
          %p167 = scmp.lt.s32.totalorder %s19, 1
          %s168 = scalar_select %p167, %s19, 1
          %s169 = smul.addr %s168, 16
          %s170 = smul.addr %s169, 8
          %s171 = scalar_lea.vmem %s1, %s170
        $region24: #{tpu_custom_call.1} parent=15 // pred_fallthru
          _
        // Predicated region
        $region25: #{tpu_custom_call.1} parent=15 // pred_check
          %p172 = pneg %p98
        $region26: #{tpu_custom_call.1} parent=15 // pred_check_branch
          %174 = sbr.rel (%p172) target = $region28
        $region27: #{tpu_custom_call.1} parent=15 // pred_region
          %p175 = scmp.lt.s32.totalorder %s19, 1
          %s176 = scalar_select %p175, %s19, 1
          %s177 = smul.addr %s176, 2
          %s178 = scalar_lea.vmem %s2, %s177
        $region28: #{tpu_custom_call.1} parent=15 // pred_fallthru
          _
      $region16: #{tpu_custom_call.1} parent=5 // pred_fallthru
        _
      %p179 = scmp.le.s32.totalorder 1, %s12
      %p180 = scmp.lt.s32.totalorder %s12, 3
      %p181 = pnand %p179, %p180
      %p182 = pneg %p181
      // Predicated region
      $region29: #{tpu_custom_call.1} parent=5 // pred_check
        _
      $region30: #{tpu_custom_call.1} parent=5 // pred_check_branch
        %184 = sbr.rel (%p181) target = $region32
      $region31: #{tpu_custom_call.1} parent=5 // pred_region
        %s185 = ssub.s32 %s12, 1
        %s186 = smul.u32 2, %s22
        %p187 = scmp.lt.s32.totalorder %s21, 1
        %s188 = scalar_select %p187, %s21, 1
        %p189 = scmp.lt.s32.totalorder %s186, 1
        %s190 = scalar_select %p189, %s186, 1
        %s191 = smul.addr %s188, 2
        %s192 = sadd.s32 %s190, %s191
        %s193 = smul.addr %s192, 8
        %s194 = scalar_lea.vmem %s0, %s193
        %p195 = pneg %p52
        %p196 = pneg %p49
        %p197 = scmp.lt.s32.totalorder %s21, 1
        %s198 = scalar_select %p197, %s21, 1
        %s199 = smul.addr %s198, 16
        %s200 = smul.addr %s199, 8
        %s201 = scalar_lea.vmem %s1, %s200
        %p202 = pneg %p78
        %p203 = pneg %p75
        %p204 = scmp.lt.s32.totalorder %s21, 1
        %s205 = scalar_select %p204, %s21, 1
        %s206 = smul.addr %s205, 2
        %s207 = scalar_lea.vmem %s2, %s206
        %p208 = pneg %p104
        %p209 = pneg %p101
        %p210 = pneg %p132
        %p211 = pneg %p129
        %s212 = sand.u32 %s119, 1
        %s213 = scalar_lea.sflag [#allocation3], %s212
        %s214 = sand.u32 %s119, 1
        %s215 = smul.addr %s214, 16
        %s216 = scalar_lea.vmem [#allocation2], %s215
        %s217 = smul.u32 2, %s22
        %p218 = scmp.lt.s32.totalorder %s21, 1
        %s219 = scalar_select %p218, %s21, 1
        %p220 = scmp.lt.s32.totalorder %s217, 1
        %s221 = scalar_select %p220, %s217, 1
        %s222 = smul.addr %s219, 2
        %s223 = sadd.s32 %s221, %s222
        %s224 = smul.addr %s223, 8
        %s225 = scalar_lea.vmem %s0, %s224
        %s226 = smul.u32 2, %s22
        %p227 = scmp.lt.s32.totalorder %s21, 1
        %s228 = scalar_select %p227, %s21, 1
        %s229 = smul.addr %s228, 16
        %s230 = smul.addr %s229, 8
        %s231 = scalar_lea.vmem %s1, %s230
        %p232 = scmp.lt.s32.totalorder %s21, 1
        %s233 = scalar_select %p232, %s21, 1
        %s234 = smul.addr %s233, 2
        %s235 = scalar_lea.vmem %s2, %s234
        %s236 = smul.u32 2, %s22
        %v237 = vld [vmem:[%s225] sm:$0xff]
        %v238 = vld [vmem:[%s225 + $0x8] sm:$0xff]
        %v239 = vld [vmem:[%s231] sm:$0xff]
        %v240 = vld [vmem:[%s231 + $0x8] sm:$0xff]
        %v241 = vld [vmem:[%s231 + $0x10] sm:$0xff]
        %v242 = vld [vmem:[%s231 + $0x18] sm:$0xff]
        %v243 = vld [vmem:[%s231 + $0x20] sm:$0xff]
        %v244 = vld [vmem:[%s231 + $0x28] sm:$0xff]
        %v245 = vld [vmem:[%s231 + $0x30] sm:$0xff]
        %v246 = vld [vmem:[%s231 + $0x38] sm:$0xff]
        %v247 = vld [vmem:[%s231 + $0x40] sm:$0xff]
        %v248 = vld [vmem:[%s231 + $0x48] sm:$0xff]
        %v249 = vld [vmem:[%s231 + $0x50] sm:$0xff]
        %v250 = vld [vmem:[%s231 + $0x58] sm:$0xff]
        %v251 = vld [vmem:[%s231 + $0x60] sm:$0xff]
        %v252 = vld [vmem:[%s231 + $0x68] sm:$0xff]
        %v253 = vld [vmem:[%s231 + $0x70] sm:$0xff]
        %v254 = vld [vmem:[%s231 + $0x78] sm:$0xff]
        %255 = vmatprep.subr.mxu0 0.0
        %v256 = vand.u32 %v239, 4294901760
        %257 = vmatpush1.msra.mxu0 %v256
        %258 = vmatprep.subr.mxu0 0.0
        %v259 = vand.u32 %v240, 4294901760
        %260 = vmatpush1.msra.mxu0 %v259
        %261 = vmatprep.subr.mxu0 0.0
        %v262 = vand.u32 %v241, 4294901760
        %263 = vmatpush1.msra.mxu0 %v262
        %264 = vmatprep.subr.mxu0 0.0
        %v265 = vand.u32 %v242, 4294901760
        %266 = vmatpush1.msra.mxu0 %v265
        %267 = vmatprep.subr.mxu0 0.0
        %v268 = vand.u32 %v243, 4294901760
        %269 = vmatpush1.msra.mxu0 %v268
        %270 = vmatprep.subr.mxu0 0.0
        %v271 = vand.u32 %v244, 4294901760
        %272 = vmatpush1.msra.mxu0 %v271
        %273 = vmatprep.subr.mxu0 0.0
        %v274 = vand.u32 %v245, 4294901760
        %275 = vmatpush1.msra.mxu0 %v274
        %276 = vmatprep.subr.mxu0 0.0
        %v277 = vand.u32 %v246, 4294901760
        %278 = vmatpush1.msra.mxu0 %v277
        %279 = vmatprep.subr.mxu0 0.0
        %v280 = vand.u32 %v247, 4294901760
        %281 = vmatpush1.msra.mxu0 %v280
        %282 = vmatprep.subr.mxu0 0.0
        %v283 = vand.u32 %v248, 4294901760
        %284 = vmatpush1.msra.mxu0 %v283
        %285 = vmatprep.subr.mxu0 0.0
        %v286 = vand.u32 %v249, 4294901760
        %287 = vmatpush1.msra.mxu0 %v286
        %288 = vmatprep.subr.mxu0 0.0
        %v289 = vand.u32 %v250, 4294901760
        %290 = vmatpush1.msra.mxu0 %v289
        %291 = vmatprep.subr.mxu0 0.0
        %v292 = vand.u32 %v251, 4294901760
        %293 = vmatpush1.msra.mxu0 %v292
        %294 = vmatprep.subr.mxu0 0.0
        %v295 = vand.u32 %v252, 4294901760
        %296 = vmatpush1.msra.mxu0 %v295
        %297 = vmatprep.subr.mxu0 0.0
        %v298 = vand.u32 %v253, 4294901760
        %299 = vmatpush1.msra.mxu0 %v298
        %300 = vmatprep.subr.mxu0 0.0
        %v301 = vand.u32 %v254, 4294901760
        %302 = vmatpush1.msra.mxu0 %v301
        %303 = vmatprep.subr.mxu0 0.0
        %304 = vmatpush1.msra.mxu0 0.0
        %305 = vmatprep.subr.mxu0 0.0
        %306 = vmatpush1.msra.mxu0 0.0
        %307 = vmatprep.subr.mxu0 0.0
        %308 = vmatpush1.msra.mxu0 0.0
        %309 = vmatprep.subr.mxu0 0.0
        %310 = vmatpush1.msra.mxu0 0.0
        %311 = vmatprep.subr.mxu0 0.0
        %312 = vmatpush1.msra.mxu0 0.0
        %313 = vmatprep.subr.mxu0 0.0
        %314 = vmatpush1.msra.mxu0 0.0
        %315 = vmatprep.subr.mxu0 0.0
        %316 = vmatpush1.msra.mxu0 0.0
        %317 = vmatprep.subr.mxu0 0.0
        %318 = vmatpush1.msra.mxu0 0.0
        %319 = vmatprep.subr.mxu0 0.0
        %320 = vmatpush1.msra.mxu0 0.0
        %321 = vmatprep.subr.mxu0 0.0
        %322 = vmatpush1.msra.mxu0 0.0
        %323 = vmatprep.subr.mxu0 0.0
        %324 = vmatpush1.msra.mxu0 0.0
        %325 = vmatprep.subr.mxu0 0.0
        %326 = vmatpush1.msra.mxu0 0.0
        %327 = vmatprep.subr.mxu0 0.0
        %328 = vmatpush1.msra.mxu0 0.0
        %329 = vmatprep.subr.mxu0 0.0
        %330 = vmatpush1.msra.mxu0 0.0
        %331 = vmatprep.subr.mxu0 0.0
        %332 = vmatpush1.msra.mxu0 0.0
        %333 = vmatprep.subr.mxu0 0.0
        %334 = vmatpush1.msra.mxu0 0.0
        %335 = vmatprep.mubr.f32.mxu0 0.0
        %v336 = vand.u32 %v237, 4294901760
        %v337 = vsub.f32 %v237, %v336
        %v338 = vand.u32 %v337, 4294901760
        %v339 = vsub.f32 %v337, %v338
        %v340 = vand.u32 %v339, 4294901760
        %341 = vmatmul.mubr.f32.gmra.mrb[0].mxu0 %v340
        %v342 = vpop.f32.mrb[0].mxu0
        %v343 = vadd.f32 0.0, %v342
        %v344 = vpop.f32.mrb[0].mxu0
        %345 = vmatprep.mubr.f32.mxu0 0.0
        %v346 = vand.u32 %v238, 4294901760
        %v347 = vsub.f32 %v238, %v346
        %v348 = vand.u32 %v347, 4294901760
        %v349 = vsub.f32 %v347, %v348
        %v350 = vand.u32 %v349, 4294901760
        %351 = vmatmul.mubr.f32.gmra.mrb[0].mxu0 %v350
        %v352 = vpop.f32.mrb[0].mxu0
        %v353 = vadd.f32 0.0, %v352
        %v354 = vpop.f32.mrb[0].mxu0
        %355 = vdwg.mxu0
        %356 = vmatprep.subr.mxu0 0.0
        %v357 = vand.u32 %v239, 4294901760
        %v358 = vsub.f32 %v239, %v357
        %v359 = vand.u32 %v358, 4294901760
        %v360 = vsub.f32 %v358, %v359
        %v361 = vand.u32 %v360, 4294901760
        %362 = vmatpush1.msra.mxu0 %v361
        %363 = vmatprep.subr.mxu0 0.0
        %v364 = vand.u32 %v240, 4294901760
        %v365 = vsub.f32 %v240, %v364
        %v366 = vand.u32 %v365, 4294901760
        %v367 = vsub.f32 %v365, %v366
        %v368 = vand.u32 %v367, 4294901760
        %369 = vmatpush1.msra.mxu0 %v368
        %370 = vmatprep.subr.mxu0 0.0
        %v371 = vand.u32 %v241, 4294901760
        %v372 = vsub.f32 %v241, %v371
        %v373 = vand.u32 %v372, 4294901760
        %v374 = vsub.f32 %v372, %v373
        %v375 = vand.u32 %v374, 4294901760
        %376 = vmatpush1.msra.mxu0 %v375
        %377 = vmatprep.subr.mxu0 0.0
        %v378 = vand.u32 %v242, 4294901760
        %v379 = vsub.f32 %v242, %v378
        %v380 = vand.u32 %v379, 4294901760
        %v381 = vsub.f32 %v379, %v380
        %v382 = vand.u32 %v381, 4294901760
        %383 = vmatpush1.msra.mxu0 %v382
        %384 = vmatprep.subr.mxu0 0.0
        %v385 = vand.u32 %v243, 4294901760
        %v386 = vsub.f32 %v243, %v385
        %v387 = vand.u32 %v386, 4294901760
        %v388 = vsub.f32 %v386, %v387
        %v389 = vand.u32 %v388, 4294901760
        %390 = vmatpush1.msra.mxu0 %v389
        %391 = vmatprep.subr.mxu0 0.0
        %v392 = vand.u32 %v244, 4294901760
        %v393 = vsub.f32 %v244, %v392
        %v394 = vand.u32 %v393, 4294901760
        %v395 = vsub.f32 %v393, %v394
        %v396 = vand.u32 %v395, 4294901760
        %397 = vmatpush1.msra.mxu0 %v396
        %398 = vmatprep.subr.mxu0 0.0
        %v399 = vand.u32 %v245, 4294901760
        %v400 = vsub.f32 %v245, %v399
        %v401 = vand.u32 %v400, 4294901760
        %v402 = vsub.f32 %v400, %v401
        %v403 = vand.u32 %v402, 4294901760
        %404 = vmatpush1.msra.mxu0 %v403
        %405 = vmatprep.subr.mxu0 0.0
        %v406 = vand.u32 %v246, 4294901760
        %v407 = vsub.f32 %v246, %v406
        %v408 = vand.u32 %v407, 4294901760
        %v409 = vsub.f32 %v407, %v408
        %v410 = vand.u32 %v409, 4294901760
        %411 = vmatpush1.msra.mxu0 %v410
        %412 = vmatprep.subr.mxu0 0.0
        %v413 = vand.u32 %v247, 4294901760
        %v414 = vsub.f32 %v247, %v413
        %v415 = vand.u32 %v414, 4294901760
        %v416 = vsub.f32 %v414, %v415
        %v417 = vand.u32 %v416, 4294901760
        %418 = vmatpush1.msra.mxu0 %v417
        %419 = vmatprep.subr.mxu0 0.0
        %v420 = vand.u32 %v248, 4294901760
        %v421 = vsub.f32 %v248, %v420
        %v422 = vand.u32 %v421, 4294901760
        %v423 = vsub.f32 %v421, %v422
        %v424 = vand.u32 %v423, 4294901760
        %425 = vmatpush1.msra.mxu0 %v424
        %426 = vmatprep.subr.mxu0 0.0
        %v427 = vand.u32 %v249, 4294901760
        %v428 = vsub.f32 %v249, %v427
        %v429 = vand.u32 %v428, 4294901760
        %v430 = vsub.f32 %v428, %v429
        %v431 = vand.u32 %v430, 4294901760
        %432 = vmatpush1.msra.mxu0 %v431
        %433 = vmatprep.subr.mxu0 0.0
        %v434 = vand.u32 %v250, 4294901760
        %v435 = vsub.f32 %v250, %v434
        %v436 = vand.u32 %v435, 4294901760
        %v437 = vsub.f32 %v435, %v436
        %v438 = vand.u32 %v437, 4294901760
        %439 = vmatpush1.msra.mxu0 %v438
        %440 = vmatprep.subr.mxu0 0.0
        %v441 = vand.u32 %v251, 4294901760
        %v442 = vsub.f32 %v251, %v441
        %v443 = vand.u32 %v442, 4294901760
        %v444 = vsub.f32 %v442, %v443
        %v445 = vand.u32 %v444, 4294901760
        %446 = vmatpush1.msra.mxu0 %v445
        %447 = vmatprep.subr.mxu0 0.0
        %v448 = vand.u32 %v252, 4294901760
        %v449 = vsub.f32 %v252, %v448
        %v450 = vand.u32 %v449, 4294901760
        %v451 = vsub.f32 %v449, %v450
        %v452 = vand.u32 %v451, 4294901760
        %453 = vmatpush1.msra.mxu0 %v452
        %454 = vmatprep.subr.mxu0 0.0
        %v455 = vand.u32 %v253, 4294901760
        %v456 = vsub.f32 %v253, %v455
        %v457 = vand.u32 %v456, 4294901760
        %v458 = vsub.f32 %v456, %v457
        %v459 = vand.u32 %v458, 4294901760
        %460 = vmatpush1.msra.mxu0 %v459
        %461 = vmatprep.subr.mxu0 0.0
        %v462 = vand.u32 %v254, 4294901760
        %v463 = vsub.f32 %v254, %v462
        %v464 = vand.u32 %v463, 4294901760
        %v465 = vsub.f32 %v463, %v464
        %v466 = vand.u32 %v465, 4294901760
        %467 = vmatpush1.msra.mxu0 %v466
        %468 = vmatprep.subr.mxu0 0.0
        %469 = vmatpush1.msra.mxu0 0.0
        %470 = vmatprep.subr.mxu0 0.0
        %471 = vmatpush1.msra.mxu0 0.0
        %472 = vmatprep.subr.mxu0 0.0
        %473 = vmatpush1.msra.mxu0 0.0
        %474 = vmatprep.subr.mxu0 0.0
        %475 = vmatpush1.msra.mxu0 0.0
        %476 = vmatprep.subr.mxu0 0.0
        %477 = vmatpush1.msra.mxu0 0.0
        %478 = vmatprep.subr.mxu0 0.0
        %479 = vmatpush1.msra.mxu0 0.0
        %480 = vmatprep.subr.mxu0 0.0
        %481 = vmatpush1.msra.mxu0 0.0
        %482 = vmatprep.subr.mxu0 0.0
        %483 = vmatpush1.msra.mxu0 0.0
        %484 = vmatprep.subr.mxu0 0.0
        %485 = vmatpush1.msra.mxu0 0.0
        %486 = vmatprep.subr.mxu0 0.0
        %487 = vmatpush1.msra.mxu0 0.0
        %488 = vmatprep.subr.mxu0 0.0
        %489 = vmatpush1.msra.mxu0 0.0
        %490 = vmatprep.subr.mxu0 0.0
        %491 = vmatpush1.msra.mxu0 0.0
        %492 = vmatprep.subr.mxu0 0.0
        %493 = vmatpush1.msra.mxu0 0.0
        %494 = vmatprep.subr.mxu0 0.0
        %495 = vmatpush1.msra.mxu0 0.0
        %496 = vmatprep.subr.mxu0 0.0
        %497 = vmatpush1.msra.mxu0 0.0
        %498 = vmatprep.subr.mxu0 0.0
        %499 = vmatpush1.msra.mxu0 0.0
        %500 = vmatprep.mubr.f32.mxu0 0.0
        %v501 = vand.u32 %v237, 4294901760
        %502 = vmatmul.mubr.f32.gmra.mrb[0].mxu0 %v501
        %v503 = vpop.f32.mrb[0].mxu0
        %v504 = vadd.f32 %v343, %v503
        %v505 = vpop.f32.mrb[0].mxu0
        %506 = vmatprep.mubr.f32.mxu0 0.0
        %v507 = vand.u32 %v238, 4294901760
        %508 = vmatmul.mubr.f32.gmra.mrb[0].mxu0 %v507
        %v509 = vpop.f32.mrb[0].mxu0
        %v510 = vadd.f32 %v353, %v509
        %v511 = vpop.f32.mrb[0].mxu0
        %512 = vdwg.mxu0
        %513 = vmatprep.subr.mxu0 0.0
        %v514 = vand.u32 %v239, 4294901760
        %v515 = vsub.f32 %v239, %v514
        %516 = vmatpush1.msra.mxu0 %v515
        %517 = vmatprep.subr.mxu0 0.0
        %v518 = vand.u32 %v240, 4294901760
        %v519 = vsub.f32 %v240, %v518
        %520 = vmatpush1.msra.mxu0 %v519
        %521 = vmatprep.subr.mxu0 0.0
        %v522 = vand.u32 %v241, 4294901760
        %v523 = vsub.f32 %v241, %v522
        %524 = vmatpush1.msra.mxu0 %v523
        %525 = vmatprep.subr.mxu0 0.0
        %v526 = vand.u32 %v242, 4294901760
        %v527 = vsub.f32 %v242, %v526
        %528 = vmatpush1.msra.mxu0 %v527
        %529 = vmatprep.subr.mxu0 0.0
        %v530 = vand.u32 %v243, 4294901760
        %v531 = vsub.f32 %v243, %v530
        %532 = vmatpush1.msra.mxu0 %v531
        %533 = vmatprep.subr.mxu0 0.0
        %v534 = vand.u32 %v244, 4294901760
        %v535 = vsub.f32 %v244, %v534
        %536 = vmatpush1.msra.mxu0 %v535
        %537 = vmatprep.subr.mxu0 0.0
        %v538 = vand.u32 %v245, 4294901760
        %v539 = vsub.f32 %v245, %v538
        %540 = vmatpush1.msra.mxu0 %v539
        %541 = vmatprep.subr.mxu0 0.0
        %v542 = vand.u32 %v246, 4294901760
        %v543 = vsub.f32 %v246, %v542
        %544 = vmatpush1.msra.mxu0 %v543
        %545 = vmatprep.subr.mxu0 0.0
        %v546 = vand.u32 %v247, 4294901760
        %v547 = vsub.f32 %v247, %v546
        %548 = vmatpush1.msra.mxu0 %v547
        %549 = vmatprep.subr.mxu0 0.0
        %v550 = vand.u32 %v248, 4294901760
        %v551 = vsub.f32 %v248, %v550
        %552 = vmatpush1.msra.mxu0 %v551
        %553 = vmatprep.subr.mxu0 0.0
        %v554 = vand.u32 %v249, 4294901760
        %v555 = vsub.f32 %v249, %v554
        %556 = vmatpush1.msra.mxu0 %v555
        %557 = vmatprep.subr.mxu0 0.0
        %v558 = vand.u32 %v250, 4294901760
        %v559 = vsub.f32 %v250, %v558
        %560 = vmatpush1.msra.mxu0 %v559
        %561 = vmatprep.subr.mxu0 0.0
        %v562 = vand.u32 %v251, 4294901760
        %v563 = vsub.f32 %v251, %v562
        %564 = vmatpush1.msra.mxu0 %v563
        %565 = vmatprep.subr.mxu0 0.0
        %v566 = vand.u32 %v252, 4294901760
        %v567 = vsub.f32 %v252, %v566
        %568 = vmatpush1.msra.mxu0 %v567
        %569 = vmatprep.subr.mxu0 0.0
        %v570 = vand.u32 %v253, 4294901760
        %v571 = vsub.f32 %v253, %v570
        %572 = vmatpush1.msra.mxu0 %v571
        %573 = vmatprep.subr.mxu0 0.0
        %v574 = vand.u32 %v254, 4294901760
        %v575 = vsub.f32 %v254, %v574
        %576 = vmatpush1.msra.mxu0 %v575
        %577 = vmatprep.subr.mxu0 0.0
        %578 = vmatpush1.msra.mxu0 0.0
        %579 = vmatprep.subr.mxu0 0.0
        %580 = vmatpush1.msra.mxu0 0.0
        %581 = vmatprep.subr.mxu0 0.0
        %582 = vmatpush1.msra.mxu0 0.0
        %583 = vmatprep.subr.mxu0 0.0
        %584 = vmatpush1.msra.mxu0 0.0
        %585 = vmatprep.subr.mxu0 0.0
        %586 = vmatpush1.msra.mxu0 0.0
        %587 = vmatprep.subr.mxu0 0.0
        %588 = vmatpush1.msra.mxu0 0.0
        %589 = vmatprep.subr.mxu0 0.0
        %590 = vmatpush1.msra.mxu0 0.0
        %591 = vmatprep.subr.mxu0 0.0
        %592 = vmatpush1.msra.mxu0 0.0
        %593 = vmatprep.subr.mxu0 0.0
        %594 = vmatpush1.msra.mxu0 0.0
        %595 = vmatprep.subr.mxu0 0.0
        %596 = vmatpush1.msra.mxu0 0.0
        %597 = vmatprep.subr.mxu0 0.0
        %598 = vmatpush1.msra.mxu0 0.0
        %599 = vmatprep.subr.mxu0 0.0
        %600 = vmatpush1.msra.mxu0 0.0
        %601 = vmatprep.subr.mxu0 0.0
        %602 = vmatpush1.msra.mxu0 0.0
        %603 = vmatprep.subr.mxu0 0.0
        %604 = vmatpush1.msra.mxu0 0.0
        %605 = vmatprep.subr.mxu0 0.0
        %606 = vmatpush1.msra.mxu0 0.0
        %607 = vmatprep.subr.mxu0 0.0
        %608 = vmatpush1.msra.mxu0 0.0
        %609 = vmatprep.mubr.f32.mxu0 0.0
        %v610 = vand.u32 %v237, 4294901760
        %v611 = vsub.f32 %v237, %v610
        %612 = vmatmul.mubr.f32.gmra.mrb[0].mxu0 %v611
        %v613 = vpop.f32.mrb[0].mxu0
        %v614 = vadd.f32 %v504, %v613
        %v615 = vpop.f32.mrb[0].mxu0
        %616 = vmatprep.mubr.f32.mxu0 0.0
        %v617 = vand.u32 %v238, 4294901760
        %v618 = vsub.f32 %v238, %v617
        %619 = vmatmul.mubr.f32.gmra.mrb[0].mxu0 %v618
        %v620 = vpop.f32.mrb[0].mxu0
        %v621 = vadd.f32 %v510, %v620
        %v622 = vpop.f32.mrb[0].mxu0
        %623 = vdwg.mxu0
        %624 = vmatprep.subr.mxu0 0.0
        %v625 = vand.u32 %v239, 4294901760
        %626 = vmatpush1.msra.mxu0 %v625
        %627 = vmatprep.subr.mxu0 0.0
        %v628 = vand.u32 %v240, 4294901760
        %629 = vmatpush1.msra.mxu0 %v628
        %630 = vmatprep.subr.mxu0 0.0
        %v631 = vand.u32 %v241, 4294901760
        %632 = vmatpush1.msra.mxu0 %v631
        %633 = vmatprep.subr.mxu0 0.0
        %v634 = vand.u32 %v242, 4294901760
        %635 = vmatpush1.msra.mxu0 %v634
        %636 = vmatprep.subr.mxu0 0.0
        %v637 = vand.u32 %v243, 4294901760
        %638 = vmatpush1.msra.mxu0 %v637
        %639 = vmatprep.subr.mxu0 0.0
        %v640 = vand.u32 %v244, 4294901760
        %641 = vmatpush1.msra.mxu0 %v640
        %642 = vmatprep.subr.mxu0 0.0
        %v643 = vand.u32 %v245, 4294901760
        %644 = vmatpush1.msra.mxu0 %v643
        %645 = vmatprep.subr.mxu0 0.0
        %v646 = vand.u32 %v246, 4294901760
        %647 = vmatpush1.msra.mxu0 %v646
        %648 = vmatprep.subr.mxu0 0.0
        %v649 = vand.u32 %v247, 4294901760
        %650 = vmatpush1.msra.mxu0 %v649
        %651 = vmatprep.subr.mxu0 0.0
        %v652 = vand.u32 %v248, 4294901760
        %653 = vmatpush1.msra.mxu0 %v652
        %654 = vmatprep.subr.mxu0 0.0
        %v655 = vand.u32 %v249, 4294901760
        %656 = vmatpush1.msra.mxu0 %v655
        %657 = vmatprep.subr.mxu0 0.0
        %v658 = vand.u32 %v250, 4294901760
        %659 = vmatpush1.msra.mxu0 %v658
        %660 = vmatprep.subr.mxu0 0.0
        %v661 = vand.u32 %v251, 4294901760
        %662 = vmatpush1.msra.mxu0 %v661
        %663 = vmatprep.subr.mxu0 0.0
        %v664 = vand.u32 %v252, 4294901760
        %665 = vmatpush1.msra.mxu0 %v664
        %666 = vmatprep.subr.mxu0 0.0
        %v667 = vand.u32 %v253, 4294901760
        %668 = vmatpush1.msra.mxu0 %v667
        %669 = vmatprep.subr.mxu0 0.0
        %v670 = vand.u32 %v254, 4294901760
        %671 = vmatpush1.msra.mxu0 %v670
        %672 = vmatprep.subr.mxu0 0.0
        %673 = vmatpush1.msra.mxu0 0.0
        %674 = vmatprep.subr.mxu0 0.0
        %675 = vmatpush1.msra.mxu0 0.0
        %676 = vmatprep.subr.mxu0 0.0
        %677 = vmatpush1.msra.mxu0 0.0
        %678 = vmatprep.subr.mxu0 0.0
        %679 = vmatpush1.msra.mxu0 0.0
        %680 = vmatprep.subr.mxu0 0.0
        %681 = vmatpush1.msra.mxu0 0.0
        %682 = vmatprep.subr.mxu0 0.0
        %683 = vmatpush1.msra.mxu0 0.0
        %684 = vmatprep.subr.mxu0 0.0
        %685 = vmatpush1.msra.mxu0 0.0
        %686 = vmatprep.subr.mxu0 0.0
        %687 = vmatpush1.msra.mxu0 0.0
        %688 = vmatprep.subr.mxu0 0.0
        %689 = vmatpush1.msra.mxu0 0.0
        %690 = vmatprep.subr.mxu0 0.0
        %691 = vmatpush1.msra.mxu0 0.0
        %692 = vmatprep.subr.mxu0 0.0
        %693 = vmatpush1.msra.mxu0 0.0
        %694 = vmatprep.subr.mxu0 0.0
        %695 = vmatpush1.msra.mxu0 0.0
        %696 = vmatprep.subr.mxu0 0.0
        %697 = vmatpush1.msra.mxu0 0.0
        %698 = vmatprep.subr.mxu0 0.0
        %699 = vmatpush1.msra.mxu0 0.0
        %700 = vmatprep.subr.mxu0 0.0
        %701 = vmatpush1.msra.mxu0 0.0
        %702 = vmatprep.subr.mxu0 0.0
        %703 = vmatpush1.msra.mxu0 0.0
        %704 = vmatprep.mubr.f32.mxu0 0.0
        %v705 = vand.u32 %v237, 4294901760
        %v706 = vsub.f32 %v237, %v705
        %v707 = vand.u32 %v706, 4294901760
        %708 = vmatmul.mubr.f32.gmra.mrb[0].mxu0 %v707
        %v709 = vpop.f32.mrb[0].mxu0
        %v710 = vadd.f32 %v614, %v709
        %v711 = vpop.f32.mrb[0].mxu0
        %712 = vmatprep.mubr.f32.mxu0 0.0
        %v713 = vand.u32 %v238, 4294901760
        %v714 = vsub.f32 %v238, %v713
        %v715 = vand.u32 %v714, 4294901760
        %716 = vmatmul.mubr.f32.gmra.mrb[0].mxu0 %v715
        %v717 = vpop.f32.mrb[0].mxu0
        %v718 = vadd.f32 %v621, %v717
        %v719 = vpop.f32.mrb[0].mxu0
        %720 = vdwg.mxu0
        %721 = vmatprep.subr.mxu0 0.0
        %v722 = vand.u32 %v239, 4294901760
        %v723 = vsub.f32 %v239, %v722
        %v724 = vand.u32 %v723, 4294901760
        %725 = vmatpush1.msra.mxu0 %v724
        %726 = vmatprep.subr.mxu0 0.0
        %v727 = vand.u32 %v240, 4294901760
        %v728 = vsub.f32 %v240, %v727
        %v729 = vand.u32 %v728, 4294901760
        %730 = vmatpush1.msra.mxu0 %v729
        %731 = vmatprep.subr.mxu0 0.0
        %v732 = vand.u32 %v241, 4294901760
        %v733 = vsub.f32 %v241, %v732
        %v734 = vand.u32 %v733, 4294901760
        %735 = vmatpush1.msra.mxu0 %v734
        %736 = vmatprep.subr.mxu0 0.0
        %v737 = vand.u32 %v242, 4294901760
        %v738 = vsub.f32 %v242, %v737
        %v739 = vand.u32 %v738, 4294901760
        %740 = vmatpush1.msra.mxu0 %v739
        %741 = vmatprep.subr.mxu0 0.0
        %v742 = vand.u32 %v243, 4294901760
        %v743 = vsub.f32 %v243, %v742
        %v744 = vand.u32 %v743, 4294901760
        %745 = vmatpush1.msra.mxu0 %v744
        %746 = vmatprep.subr.mxu0 0.0
        %v747 = vand.u32 %v244, 4294901760
        %v748 = vsub.f32 %v244, %v747
        %v749 = vand.u32 %v748, 4294901760
        %750 = vmatpush1.msra.mxu0 %v749
        %751 = vmatprep.subr.mxu0 0.0
        %v752 = vand.u32 %v245, 4294901760
        %v753 = vsub.f32 %v245, %v752
        %v754 = vand.u32 %v753, 4294901760
        %755 = vmatpush1.msra.mxu0 %v754
        %756 = vmatprep.subr.mxu0 0.0
        %v757 = vand.u32 %v246, 4294901760
        %v758 = vsub.f32 %v246, %v757
        %v759 = vand.u32 %v758, 4294901760
        %760 = vmatpush1.msra.mxu0 %v759
        %761 = vmatprep.subr.mxu0 0.0
        %v762 = vand.u32 %v247, 4294901760
        %v763 = vsub.f32 %v247, %v762
        %v764 = vand.u32 %v763, 4294901760
        %765 = vmatpush1.msra.mxu0 %v764
        %766 = vmatprep.subr.mxu0 0.0
        %v767 = vand.u32 %v248, 4294901760
        %v768 = vsub.f32 %v248, %v767
        %v769 = vand.u32 %v768, 4294901760
        %770 = vmatpush1.msra.mxu0 %v769
        %771 = vmatprep.subr.mxu0 0.0
        %v772 = vand.u32 %v249, 4294901760
        %v773 = vsub.f32 %v249, %v772
        %v774 = vand.u32 %v773, 4294901760
        %775 = vmatpush1.msra.mxu0 %v774
        %776 = vmatprep.subr.mxu0 0.0
        %v777 = vand.u32 %v250, 4294901760
        %v778 = vsub.f32 %v250, %v777
        %v779 = vand.u32 %v778, 4294901760
        %780 = vmatpush1.msra.mxu0 %v779
        %781 = vmatprep.subr.mxu0 0.0
        %v782 = vand.u32 %v251, 4294901760
        %v783 = vsub.f32 %v251, %v782
        %v784 = vand.u32 %v783, 4294901760
        %785 = vmatpush1.msra.mxu0 %v784
        %786 = vmatprep.subr.mxu0 0.0
        %v787 = vand.u32 %v252, 4294901760
        %v788 = vsub.f32 %v252, %v787
        %v789 = vand.u32 %v788, 4294901760
        %790 = vmatpush1.msra.mxu0 %v789
        %791 = vmatprep.subr.mxu0 0.0
        %v792 = vand.u32 %v253, 4294901760
        %v793 = vsub.f32 %v253, %v792
        %v794 = vand.u32 %v793, 4294901760
        %795 = vmatpush1.msra.mxu0 %v794
        %796 = vmatprep.subr.mxu0 0.0
        %v797 = vand.u32 %v254, 4294901760
        %v798 = vsub.f32 %v254, %v797
        %v799 = vand.u32 %v798, 4294901760
        %800 = vmatpush1.msra.mxu0 %v799
        %801 = vmatprep.subr.mxu0 0.0
        %802 = vmatpush1.msra.mxu0 0.0
        %803 = vmatprep.subr.mxu0 0.0
        %804 = vmatpush1.msra.mxu0 0.0
        %805 = vmatprep.subr.mxu0 0.0
        %806 = vmatpush1.msra.mxu0 0.0
        %807 = vmatprep.subr.mxu0 0.0
        %808 = vmatpush1.msra.mxu0 0.0
        %809 = vmatprep.subr.mxu0 0.0
        %810 = vmatpush1.msra.mxu0 0.0
        %811 = vmatprep.subr.mxu0 0.0
        %812 = vmatpush1.msra.mxu0 0.0
        %813 = vmatprep.subr.mxu0 0.0
        %814 = vmatpush1.msra.mxu0 0.0
        %815 = vmatprep.subr.mxu0 0.0
        %816 = vmatpush1.msra.mxu0 0.0
        %817 = vmatprep.subr.mxu0 0.0
        %818 = vmatpush1.msra.mxu0 0.0
        %819 = vmatprep.subr.mxu0 0.0
        %820 = vmatpush1.msra.mxu0 0.0
        %821 = vmatprep.subr.mxu0 0.0
        %822 = vmatpush1.msra.mxu0 0.0
        %823 = vmatprep.subr.mxu0 0.0
        %824 = vmatpush1.msra.mxu0 0.0
        %825 = vmatprep.subr.mxu0 0.0
        %826 = vmatpush1.msra.mxu0 0.0
        %827 = vmatprep.subr.mxu0 0.0
        %828 = vmatpush1.msra.mxu0 0.0
        %829 = vmatprep.subr.mxu0 0.0
        %830 = vmatpush1.msra.mxu0 0.0
        %831 = vmatprep.subr.mxu0 0.0
        %832 = vmatpush1.msra.mxu0 0.0
        %833 = vmatprep.mubr.f32.mxu0 0.0
        %v834 = vand.u32 %v237, 4294901760
        %835 = vmatmul.mubr.f32.gmra.mrb[0].mxu0 %v834
        %v836 = vpop.f32.mrb[0].mxu0
        %v837 = vadd.f32 %v710, %v836
        %v838 = vpop.f32.mrb[0].mxu0
        %839 = vmatprep.mubr.f32.mxu0 0.0
        %v840 = vand.u32 %v238, 4294901760
        %841 = vmatmul.mubr.f32.gmra.mrb[0].mxu0 %v840
        %v842 = vpop.f32.mrb[0].mxu0
        %v843 = vadd.f32 %v718, %v842
        %v844 = vpop.f32.mrb[0].mxu0
        %845 = vdwg.mxu0
        %846 = vmatprep.subr.mxu0 0.0
        %v847 = vand.u32 %v239, 4294901760
        %848 = vmatpush1.msra.mxu0 %v847
        %849 = vmatprep.subr.mxu0 0.0
        %v850 = vand.u32 %v240, 4294901760
        %851 = vmatpush1.msra.mxu0 %v850
        %852 = vmatprep.subr.mxu0 0.0
        %v853 = vand.u32 %v241, 4294901760
        %854 = vmatpush1.msra.mxu0 %v853
        %855 = vmatprep.subr.mxu0 0.0
        %v856 = vand.u32 %v242, 4294901760
        %857 = vmatpush1.msra.mxu0 %v856
        %858 = vmatprep.subr.mxu0 0.0
        %v859 = vand.u32 %v243, 4294901760
        %860 = vmatpush1.msra.mxu0 %v859
        %861 = vmatprep.subr.mxu0 0.0
        %v862 = vand.u32 %v244, 4294901760
        %863 = vmatpush1.msra.mxu0 %v862
        %864 = vmatprep.subr.mxu0 0.0
        %v865 = vand.u32 %v245, 4294901760
        %866 = vmatpush1.msra.mxu0 %v865
        %867 = vmatprep.subr.mxu0 0.0
        %v868 = vand.u32 %v246, 4294901760
        %869 = vmatpush1.msra.mxu0 %v868
        %870 = vmatprep.subr.mxu0 0.0
        %v871 = vand.u32 %v247, 4294901760
        %872 = vmatpush1.msra.mxu0 %v871
        %873 = vmatprep.subr.mxu0 0.0
        %v874 = vand.u32 %v248, 4294901760
        %875 = vmatpush1.msra.mxu0 %v874
        %876 = vmatprep.subr.mxu0 0.0
        %v877 = vand.u32 %v249, 4294901760
        %878 = vmatpush1.msra.mxu0 %v877
        %879 = vmatprep.subr.mxu0 0.0
        %v880 = vand.u32 %v250, 4294901760
        %881 = vmatpush1.msra.mxu0 %v880
        %882 = vmatprep.subr.mxu0 0.0
        %v883 = vand.u32 %v251, 4294901760
        %884 = vmatpush1.msra.mxu0 %v883
        %885 = vmatprep.subr.mxu0 0.0
        %v886 = vand.u32 %v252, 4294901760
        %887 = vmatpush1.msra.mxu0 %v886
        %888 = vmatprep.subr.mxu0 0.0
        %v889 = vand.u32 %v253, 4294901760
        %890 = vmatpush1.msra.mxu0 %v889
        %891 = vmatprep.subr.mxu0 0.0
        %v892 = vand.u32 %v254, 4294901760
        %893 = vmatpush1.msra.mxu0 %v892
        %894 = vmatprep.subr.mxu0 0.0
        %895 = vmatpush1.msra.mxu0 0.0
        %896 = vmatprep.subr.mxu0 0.0
        %897 = vmatpush1.msra.mxu0 0.0
        %898 = vmatprep.subr.mxu0 0.0
        %899 = vmatpush1.msra.mxu0 0.0
        %900 = vmatprep.subr.mxu0 0.0
        %901 = vmatpush1.msra.mxu0 0.0
        %902 = vmatprep.subr.mxu0 0.0
        %903 = vmatpush1.msra.mxu0 0.0
        %904 = vmatprep.subr.mxu0 0.0
        %905 = vmatpush1.msra.mxu0 0.0
        %906 = vmatprep.subr.mxu0 0.0
        %907 = vmatpush1.msra.mxu0 0.0
        %908 = vmatprep.subr.mxu0 0.0
        %909 = vmatpush1.msra.mxu0 0.0
        %910 = vmatprep.subr.mxu0 0.0
        %911 = vmatpush1.msra.mxu0 0.0
        %912 = vmatprep.subr.mxu0 0.0
        %913 = vmatpush1.msra.mxu0 0.0
        %914 = vmatprep.subr.mxu0 0.0
        %915 = vmatpush1.msra.mxu0 0.0
        %916 = vmatprep.subr.mxu0 0.0
        %917 = vmatpush1.msra.mxu0 0.0
        %918 = vmatprep.subr.mxu0 0.0
        %919 = vmatpush1.msra.mxu0 0.0
        %920 = vmatprep.subr.mxu0 0.0
        %921 = vmatpush1.msra.mxu0 0.0
        %922 = vmatprep.subr.mxu0 0.0
        %923 = vmatpush1.msra.mxu0 0.0
        %924 = vmatprep.subr.mxu0 0.0
        %925 = vmatpush1.msra.mxu0 0.0
        %926 = vmatprep.mubr.f32.mxu0 0.0
        %v927 = vand.u32 %v237, 4294901760
        %928 = vmatmul.mubr.f32.gmra.mrb[0].mxu0 %v927
        %v929 = vpop.f32.mrb[0].mxu0
        %v930 = vadd.f32 %v837, %v929
        %v931 = vpop.f32.mrb[0].mxu0
        %932 = vmatprep.mubr.f32.mxu0 0.0
        %v933 = vand.u32 %v238, 4294901760
        %934 = vmatmul.mubr.f32.gmra.mrb[0].mxu0 %v933
        %v935 = vpop.f32.mrb[0].mxu0
        %v936 = vadd.f32 %v843, %v935
        %v937 = vpop.f32.mrb[0].mxu0
        %938 = vdwg.mxu0
        %v939 = vmul.f32 %v930, 0.0078125
        %v940 = vmul.f32 %v936, 0.0078125
        %v941 = vmul.f32 %v237, %v237
        %v942 = vmul.f32 %v238, %v238
        %943 = vadd.xlane.f32.xlu0 %v941
        %v944 = vpop.xlane.xlu0 %943
        %945 = vadd.xlane.f32.xlu0 %v942
        %v946 = vpop.xlane.xlu0 %945
        %v947 = vrcp.pop 128.0
        %v948 = vmul.f32 %v944, %v947
        %v949 = vmul.f32 %v946, %v947
        %v950 = vmul.f32 %v939, %v939
        %v951 = vmul.f32 %v940, %v940
        %v952 = vsub.f32 %v948, %v950
        %v953 = vsub.f32 %v949, %v951
        %v954 = vadd.f32 %v952, 1e-06
        %v955 = vadd.f32 %v953, 1e-06
        %v956 = vrsqrt.pop %v954
        %v957 = vrsqrt.pop %v955
        %v958 = vld [vmem:[%s235] sm:$0x3]
        %960 = vset.pattern.permute.xlu0 16
        %961 = vperm.xlu0 %960, %v939
        %v962 = vpop.permute.xlu0 %961
        %965 = vset.pattern.permute.xlu0 16
        %966 = vperm.xlu0 %965, %v940
        %v967 = vpop.permute.xlu0 %966
        %v969 = vlaneseq
        %v970 = vshrl.u32 %v969, 7
        %v971 = vsub.s32 0, %v970
        %v972 = vrot.slane %v958, %v971
        %v973 = vmul.f32 %v962, %v972
        %v974 = vmul.f32 %v967, %v972
        %v975 = vsub.f32 %v930, %v973
        %v976 = vsub.f32 %v936, %v974
        %978 = vset.pattern.permute.xlu0 16
        %979 = vperm.xlu0 %978, %v956
        %v980 = vpop.permute.xlu0 %979
        %983 = vset.pattern.permute.xlu0 16
        %984 = vperm.xlu0 %983, %v957
        %v985 = vpop.permute.xlu0 %984
        %v987 = vmul.f32 %v980, %v975
        %v988 = vmul.f32 %v985, %v976
        %v989 = vlaneseq
        %v990 = vshrl.u32 %v989, 7
        %v991 = vsub.s32 1, %v990
        %v992 = vrot.slane %v958, %v991
        %v993 = vadd.f32 %v987, %v992
        %v994 = vadd.f32 %v988, %v992
        %vm995 = vcmask 130048
        %996 = vst.msk [vmem:[%s216] sm:$0xff] %vm995, %v993
        %997 = vst.msk [vmem:[%s216 + $0x8] sm:$0xff] %vm995, %v994
        %s998 = sand.u32 %s119, 1
        %s999 = scalar_lea.sflag [#allocation3], %s998
        %s1000 = sand.u32 %s119, 1
        %s1001 = smul.addr %s1000, 16
        %s1002 = scalar_lea.vmem [#allocation2], %s1001
        // Predicated region
        $region33: #{tpu_custom_call.1} parent=31 // pred_check
          %p1003 = pneg %p129
        $region34: #{tpu_custom_call.1} parent=31 // pred_check_branch
          %1005 = sbr.rel (%p1003) target = $region36
        $region35: #{tpu_custom_call.1} parent=31 // pred_region
          %s1006 = smul.u32 2, %s22
          %s1008 = ssub.s32 256, 256
          %1009 = vsyncadd %s999, %s1008
          %s1010 = smul.addr %s21, 2
          %s1011 = sadd.s32 %s1006, %s1010
          %s1012 = smul.addr %s1011, 128
          %s1013 = scalar_lea.hbm %s3, %s1012
          %s1014 = sshll.u32 %s1002, 4
          %s1015 = int_to_ptr.vmem [resolvable:$true] %s1014
          %1020 = dma.vmem_to_hbm [thread:$0]  %s1015, 256, %s1013, %s999, 128, 128, 8
        $region36: #{tpu_custom_call.1} parent=31 // pred_fallthru
          _
      $region32: #{tpu_custom_call.1} parent=5 // pred_fallthru
        _
      %p1021 = scmp.le.s32.totalorder 2, %s12
      // Predicated region
      $region37: #{tpu_custom_call.1} parent=5 // pred_check
        %p1022 = pneg %p1021
      $region38: #{tpu_custom_call.1} parent=5 // pred_check_branch
        %1024 = sbr.rel (%p1022) target = $region40
      $region39: #{tpu_custom_call.1} parent=5 // pred_region
        %s1025 = ssub.s32 %s12, 2
        // Predicated region
        $region41: #{tpu_custom_call.1} parent=39 // pred_check
          %p1026 = pneg %p135
        $region42: #{tpu_custom_call.1} parent=39 // pred_check_branch
          %1028 = sbr.rel (%p1026) target = $region44
        $region43: #{tpu_custom_call.1} parent=39 // pred_region
          %s1029 = sand.u32 %s120, 1
          %s1030 = scalar_lea.sflag [#allocation3], %s1029
          %s1031 = sand.u32 %s120, 1
          %s1032 = smul.addr %s1031, 16
          %s1033 = scalar_lea.vmem [#allocation2], %s1032
          %1034 = dma.done %s1030, 256
        $region44: #{tpu_custom_call.1} parent=39 // pred_fallthru
          _
      $region40: #{tpu_custom_call.1} parent=5 // pred_fallthru
        _
    $region6: #{tpu_custom_call.1} parent=1 // loop_footer
      %s16 = sadd.s32 1, %s12
    $region7: #{tpu_custom_call.1} parent=1 // loop_footer_branch
      %11 = sbr.rel target = $region3
    $region8: #{tpu_custom_call.1} parent=1 // loop_exit
      _
    %1035 = vsyncpa [#allocation3], 1
    %s1036 = scalar_lea.sflag [#allocation3], 1
    %1037 = vsyncpa %s1036, 1

</llo_original>
